<compile_context>
chip_gen: v5e
topology: v5e:2x2
jax: 0.10.0
libtpu: 0.0.40
codegen_flags: <defaults>
</compile_context>

<pallas_src>
import functools

import jax
import jax.numpy as jnp
from jax import lax
from jax.experimental import pallas as pl
from jax.experimental.pallas import tpu as pltpu


_LANE = 128
_SMALL_ELEMS = 64 * 1024      # below this, pallas_call overhead > work
_NUM_CORE_SLICES = 2          # leading "parallel" axis: TC-sharded on v7x,
                              # cheap serial loop on v5e/v6e
_MAX_FOLD_ROWS = 64           # cap on C*S rows after sublane folding
_REG_ACC_ELEMS = 32 * 1024    # keep the per-step register accumulator <= ~32 vregs
_HEADROOM = 8 << 20           # compiler-internal VMEM slack on top of footprint


def _round_up(x, m):
    return ((x + m - 1) // m) * m


def _vmem_info():
    """(pipeline budget bytes, physical VMEM bytes) — generation aware."""
    phys = 64 << 20                                    # conservative fallback (v7x)
    try:
        getter = getattr(pltpu, "get_tpu_info", None)
        if getter is not None:
            cap = getattr(getter(), "vmem_capacity_bytes", None)
            if cap:
                phys = int(cap)
    except Exception:
        pass
    budget = min(phys // 2, 48 << 20)                  # v5e/v6e: 48 MiB, v7x: 32 MiB
    return budget, phys


def _sublane_fold(c, hw, itemsize):
    """Smallest spatial factor S folded into the row axis so C*S fills the
    sublane packing (8 f32 / 16 bf16 / 32 int8); 1 if not cheaply possible."""
    pack = {4: 8, 2: 16, 1: 32}.get(itemsize, 8)
    if c % pack == 0:
        return 1
    for s in (2, 4, 8, 16, 32):
        if hw % s == 0 and (c * s) % pack == 0 and c * s <= _MAX_FOLD_ROWS:
            return s
    return 1


def _choose_tiling(r, hw_eff, itemsize, budget):
    """Returns (chunk, acc_w, n_sub, n_chunks, chunks_per_slice)."""
    pack_in = {4: 8, 2: 16, 1: 32}.get(itemsize, 8)
    r_in_pad = _round_up(r, pack_in)
    r_f32_pad = _round_up(r, 8)

    # Fixed narrow accumulator: wide enough to amortize loop overhead, narrow
    # enough to stay (mostly) register resident across the in-step fold.
    acc_w = max(_LANE, min(2048, (_REG_ACC_ELEMS // r_f32_pad) // _LANE * _LANE))

    # Largest double-buffered input chunk that fits the budget.
    acc_bytes = r_f32_pad * acc_w * 4
    per_lane = 2 * r_in_pad * itemsize
    max_chunk = max(acc_w, ((budget - acc_bytes) // per_lane) // acc_w * acc_w)

    # Aim for one chunk per core slice (bounded by VMEM) so per-step DMA is as
    # large as possible (>> the ~0.35us per-grid-step overhead).
    target = _round_up(pl.cdiv(hw_eff, _NUM_CORE_SLICES), acc_w)
    chunk = min(max_chunk, target)

    if chunk >= hw_eff:                  # whole reduction fits one block
        return hw_eff, hw_eff, 1, 1, 1

    n_chunks = pl.cdiv(hw_eff, chunk)
    rem = n_chunks % _NUM_CORE_SLICES
    if rem:
        # Prefer a slightly smaller chunk that balances the slices exactly
        # (avoids a wasted duplicate-block DMA on the padded grid cell).
        n_tgt = n_chunks + (_NUM_CORE_SLICES - rem)
        chunk2 = _round_up(pl.cdiv(hw_eff, n_tgt), acc_w)
        if pl.cdiv(hw_eff, chunk2) == n_tgt:
            chunk, n_chunks = chunk2, n_tgt
    cpc = pl.cdiv(n_chunks, _NUM_CORE_SLICES)
    return chunk, acc_w, chunk // acc_w, n_chunks, cpc


def _zul_kernel(x_ref, o_ref, acc_ref, *, hw_eff, chunk, acc_w, n_sub,
                n_chunks, cpc, grid_chunks):
    """Per-slice streaming partial row sums of a (R, HW_eff) array."""
    p = pl.program_id(0)                 # core slice  ("parallel")
    k = pl.program_id(1)                 # chunk index ("arbitrary")
    gk = p * cpc + k                     # global chunk index

    @pl.when(k == 0)
    def _init():
        acc_ref[...] = jnp.zeros_like(acc_ref)

    ragged = (hw_eff % chunk) != 0       # static

    def accumulate(masked):
        base_col = gk * chunk

        def fold(xj, col0, acc):
            xj = xj.astype(jnp.float32)  # native-dtype DMA, cast in-register
            if masked:
                # NOTE: the OOB part of the edge block holds stale VMEM; it is
                # only ever used after this mask zeroes it.
                col = col0 + lax.broadcasted_iota(jnp.int32, xj.shape, 1)
                xj = jnp.where(col < hw_eff, xj, 0.0)
            return acc + xj

        if n_sub == 1:
            acc_ref[...] = fold(x_ref[...], base_col, acc_ref[...])
        else:
            def body(j, acc):
                start = pl.multiple_of(j * acc_w, acc_w)
                return fold(x_ref[:, pl.ds(start, acc_w)], base_col + start, acc)
            acc_ref[...] = lax.fori_loop(0, n_sub, body, acc_ref[...],
                                         unroll=min(n_sub, 4))

    if (not ragged) and grid_chunks == n_chunks:
        accumulate(masked=False)                     # pure load+add steady state
    elif not ragged:
        @pl.when(gk < n_chunks)                      # skip padded duplicate cells
        def _steady():
            accumulate(masked=False)
    else:
        @pl.when(gk < n_chunks - 1)                  # steady state stays mask-free
        def _steady():
            accumulate(masked=False)

        @pl.when(gk == n_chunks - 1)                 # only the tail pays the mask
        def _tail():
            accumulate(masked=True)

    @pl.when(k == cpc - 1)
    def _finalize():
        # Single XLU lane reduce per slice; cross-channel std happens in the
        # wrapper on the tiny (num_slices, R) partial sums.
        o_ref[...] = jnp.sum(acc_ref[...], axis=1, keepdims=True)[None]


def _zul_partial_sums(x, chunk, acc_w, n_sub, n_chunks, cpc, vmem_limit):
    """x: (R, HW_eff) native dtype -> (num_slices, R, 1) f32 partial row sums."""
    r, hw_eff = x.shape
    itemsize = jnp.dtype(x.dtype).itemsize
    grid_chunks = _NUM_CORE_SLICES * cpc

    if grid_chunks == n_chunks:
        def in_index(p, k):
            return (0, p * cpc + k)
    else:
        def in_index(p, k):
            # Clamp padded grid cells to a valid block; their compute is skipped.
            return (0, jnp.minimum(p * cpc + k, n_chunks - 1))

    kernel = functools.partial(
        _zul_kernel, hw_eff=hw_eff, chunk=chunk, acc_w=acc_w, n_sub=n_sub,
        n_chunks=n_chunks, cpc=cpc, grid_chunks=grid_chunks)

    return pl.pallas_call(
        kernel,
        out_shape=jax.ShapeDtypeStruct((_NUM_CORE_SLICES, r, 1), jnp.float32),
        grid=(_NUM_CORE_SLICES, cpc),
        in_specs=[pl.BlockSpec((r, chunk), in_index)],
        out_specs=pl.BlockSpec((1, r, 1), lambda p, k: (p, 0, 0)),
        scratch_shapes=[pltpu.VMEM((r, acc_w), jnp.float32)],
        compiler_params=pltpu.CompilerParams(
            dimension_semantics=("parallel", "arbitrary"),
            vmem_limit_bytes=int(vmem_limit)),
        cost_estimate=pl.CostEstimate(
            flops=r * hw_eff,
            transcendentals=0,
            bytes_accessed=r * hw_eff * itemsize + _NUM_CORE_SLICES * r * 4),
    )(x)


def zero_uniformity_loss_forward(pred, target=None, *, loss_weight=1.0,
                                 reduction="mean"):
    """Mirrors ZeroUniformityLoss.forward (weight=None, avg_factor=None)."""
    assert reduction in ("none", "mean", "sum")
    b, c, h, w = pred.shape

    if b > 1:
        # PyTorch path: torch.zeros([B]) — data-independent, no kernel needed.
        loss = jnp.zeros((b,), dtype=jnp.float32)
    else:
        hw = h * w
        if c * hw < _SMALL_ELEMS:
            # Tiny feature maps: Pallas launch/pipeline overhead exceeds the work.
            ch_mean = jnp.mean(pred.reshape(c, hw).astype(jnp.float32), axis=1)
            loss = jnp.std(ch_mean, ddof=1).reshape((1,))
        else:
            itemsize = jnp.dtype(pred.dtype).itemsize
            s = _sublane_fold(c, hw, itemsize)
            r, hw_eff = c * s, hw // s
            x = pred.reshape(r, hw_eff)              # contiguous; native dtype

            budget, phys = _vmem_info()
            chunk, acc_w, n_sub, n_chunks, cpc = _choose_tiling(
                r, hw_eff, itemsize, budget)

            pack_in = {4: 8, 2: 16, 1: 32}.get(itemsize, 8)
            footprint = (2 * _round_up(r, pack_in) * chunk * itemsize
                         + _round_up(r, 8) * acc_w * 4)
            vmem_limit = max(16 << 20,
                             min((phys * 3) // 4, footprint + _HEADROOM))

            parts = _zul_partial_sums(x, chunk, acc_w, n_sub, n_chunks, cpc,
                                      vmem_limit)                 # (S_core, R, 1)
            row_sums = jnp.sum(parts[:, :, 0], axis=0)            # (R,)
            ch_mean = jnp.sum(row_sums.reshape(c, s), axis=1) / hw  # (C,)
            mu = jnp.mean(ch_mean)
            # Unbiased std (torch.std default, correction=1).
            # NOTE: C == 1 yields 0/0 -> NaN, matching torch.std of one element.
            var = jnp.sum((ch_mean - mu) ** 2) / (c - 1)
            loss = jnp.sqrt(var).reshape((1,))

    # weight_reduce_loss with weight=None, avg_factor=None
    if reduction == "mean":
        loss = jnp.mean(loss)
    elif reduction == "sum":
        loss = jnp.sum(loss)
    return loss_weight * loss


def _reference(pred, loss_weight=1.0, reduction="mean"):
    """Pure-JAX reference of the PyTorch semantics (verification only)."""
    b = pred.shape[0]
    if b > 1:
        loss = jnp.zeros((b,), dtype=jnp.float32)
    else:
        mean = jnp.mean(pred.astype(jnp.float32), axis=(2, 3))   # (1, C)
        loss = jnp.std(mean, axis=1, ddof=1)                     # (1,)
    if reduction == "mean":
        loss = jnp.mean(loss)
    elif reduction == "sum":
        loss = jnp.sum(loss)
    return loss_weight * loss


if __name__ == "__main__":
    key = jax.random.PRNGKey(0)
    k1, k2, k3, k4, k5 = jax.random.split(key, 5)

    # 1) Tiny batch==1 input (C=4, 16x16): pure-JAX fast path.
    p1 = jax.random.normal(k1, (1, 4, 16, 16), dtype=jnp.float32)
    out = jax.block_until_ready(zero_uniformity_loss_forward(p1, None))
    ref = _reference(p1)
    assert jnp.allclose(out, ref, rtol=1e-5, atol=1e-6), (out, ref)

    # 2) f32, chunk-aligned HW: Pallas path, two core slices, mask-free steady state.
    p2 = jax.random.normal(k2, (1, 8, 128, 128), dtype=jnp.float32)
    out = jax.block_until_ready(zero_uniformity_loss_forward(p2, None))
    ref = _reference(p2)
    assert jnp.allclose(out, ref, rtol=1e-3, atol=1e-6), (out, ref)

    # 3) bf16, C=19, ragged HW: Pallas path with masked tail chunk.
    p3 = jax.random.normal(k3, (1, 19, 100, 100), dtype=jnp.bfloat16)
    out = jax.block_until_ready(zero_uniformity_loss_forward(p3, None))
    ref = _reference(p3)
    assert jnp.allclose(out, ref, rtol=1e-3, atol=1e-6), (out, ref)

    # 4) bf16, C=8: exercises the sublane fold (C*S = 16 rows) path.
    p4 = jax.random.normal(k4, (1, 8, 128, 128), dtype=jnp.bfloat16)
    out = jax.block_until_ready(zero_uniformity_loss_forward(p4, None))
    ref = _reference(p4)
    assert jnp.allclose(out, ref, rtol=1e-3, atol=1e-6), (out, ref)

    # 5) batch > 1: loss is identically zero per the module definition.
    p5 = jax.random.normal(k5, (2, 4, 16, 16), dtype=jnp.float32)
    out = jax.block_until_ready(zero_uniformity_loss_forward(p5, None))
    assert jnp.allclose(out, 0.0), out

    print("KERNEL_OK")
</pallas_src>

<mosaic_0001>
module attributes {stable_mosaic.version = 11 : i64} {
  func.func @_zul_kernel(%arg0: i32, %arg1: i32, %arg2: memref<8x8192xf32, #tpu.memory_space<vmem>>, %arg3: memref<1x8x1xf32, #tpu.memory_space<vmem>>, %arg4: memref<8x2048xf32, #tpu.memory_space<vmem>>) attributes {dimension_semantics = [#tpu.dimension_semantics<parallel>, #tpu.dimension_semantics<arbitrary>], iteration_bounds = array<i64: 2, 1>, scalar_prefetch = 0 : i64, scratch_operands = 1 : i64, tpu.core_type = #tpu.core_type<tc>, window_params = [{transform_indices = @transform_0, window_bounds = array<i64: 8, 8192>}, {transform_indices = @transform_1, window_bounds = array<i64: 1, 8, 1>}]} {
    %c0_i32 = arith.constant 0 : i32
    %0 = arith.cmpi eq, %arg1, %c0_i32 : i32
    %1 = arith.extui %0 : i1 to i32
    %c0_i32_0 = arith.constant 0 : i32
    %2 = arith.cmpi ne, %1, %c0_i32_0 : i32
    scf.if %2 {
      %cst = arith.constant 0.000000e+00 : f32
      %28 = vector.broadcast %cst : f32 to vector<8x2048xf32>
      %c0_14 = arith.constant 0 : index
      %c0_15 = arith.constant 0 : index
      %29 = vector.load %arg4[%c0_14, %c0_15] : memref<8x2048xf32, #tpu.memory_space<vmem>>, vector<8x2048xf32>
      tpu.vector_store %arg4[%c0_14, %c0_15], %28 {strides = array<i32>} : memref<8x2048xf32, #tpu.memory_space<vmem>>, vector<8x2048xf32>,
    } else {
    }
    %c0 = arith.constant 0 : index
    %c0_1 = arith.constant 0 : index
    %3 = vector.load %arg4[%c0, %c0_1] : memref<8x2048xf32, #tpu.memory_space<vmem>>, vector<8x2048xf32>
    %c0_i32_2 = arith.constant 0 : i32
    %c2048_i32 = arith.constant 2048 : i32
    %4 = arith.muli %c0_i32_2, %c2048_i32 : i32
    %5 = tpu.assume_multiple %4, 2048 : i32
    %c0_3 = arith.constant 0 : index
    %6 = arith.index_cast %5 : i32 to index
    %7 = vector.load %arg2[%c0_3, %6] : memref<8x8192xf32, #tpu.memory_space<vmem>>, vector<8x2048xf32>
    %8 = arith.addf %3, %7 : vector<8x2048xf32>
    %c1_i32 = arith.constant 1 : i32
    %c2048_i32_4 = arith.constant 2048 : i32
    %9 = arith.muli %c1_i32, %c2048_i32_4 : i32
    %10 = tpu.assume_multiple %9, 2048 : i32
    %c0_5 = arith.constant 0 : index
    %11 = arith.index_cast %10 : i32 to index
    %12 = vector.load %arg2[%c0_5, %11] : memref<8x8192xf32, #tpu.memory_space<vmem>>, vector<8x2048xf32>
    %13 = arith.addf %8, %12 : vector<8x2048xf32>
    %c2_i32 = arith.constant 2 : i32
    %c2048_i32_6 = arith.constant 2048 : i32
    %14 = arith.muli %c2_i32, %c2048_i32_6 : i32
    %15 = tpu.assume_multiple %14, 2048 : i32
    %c0_7 = arith.constant 0 : index
    %16 = arith.index_cast %15 : i32 to index
    %17 = vector.load %arg2[%c0_7, %16] : memref<8x8192xf32, #tpu.memory_space<vmem>>, vector<8x2048xf32>
    %18 = arith.addf %13, %17 : vector<8x2048xf32>
    %c3_i32 = arith.constant 3 : i32
    %c2048_i32_8 = arith.constant 2048 : i32
    %19 = arith.muli %c3_i32, %c2048_i32_8 : i32
    %20 = tpu.assume_multiple %19, 2048 : i32
    %c0_9 = arith.constant 0 : index
    %21 = arith.index_cast %20 : i32 to index
    %22 = vector.load %arg2[%c0_9, %21] : memref<8x8192xf32, #tpu.memory_space<vmem>>, vector<8x2048xf32>
    %23 = arith.addf %18, %22 : vector<8x2048xf32>
    %c4_i32 = arith.constant 4 : i32
    %c0_10 = arith.constant 0 : index
    %c0_11 = arith.constant 0 : index
    %24 = vector.load %arg4[%c0_10, %c0_11] : memref<8x2048xf32, #tpu.memory_space<vmem>>, vector<8x2048xf32>
    tpu.vector_store %arg4[%c0_10, %c0_11], %23 {strides = array<i32>} : memref<8x2048xf32, #tpu.memory_space<vmem>>, vector<8x2048xf32>,
    %c0_i32_12 = arith.constant 0 : i32
    %25 = arith.cmpi eq, %arg1, %c0_i32_12 : i32
    %26 = arith.extui %25 : i1 to i32
    %c0_i32_13 = arith.constant 0 : i32
    %27 = arith.cmpi ne, %26, %c0_i32_13 : i32
    scf.if %27 {
      %c0_14 = arith.constant 0 : index
      %c0_15 = arith.constant 0 : index
      %28 = vector.load %arg4[%c0_14, %c0_15] : memref<8x2048xf32, #tpu.memory_space<vmem>>, vector<8x2048xf32>
      %cst = arith.constant dense<0.000000e+00> : vector<8xf32>
      %29 = vector.multi_reduction <add>, %28, %cst [1] : vector<8x2048xf32> to vector<8xf32>
      %30 = vector.shape_cast %29 : vector<8xf32> to vector<8x1xf32>
      %31 = vector.shape_cast %30 : vector<8x1xf32> to vector<1x8x1xf32>
      %c0_16 = arith.constant 0 : index
      %c0_17 = arith.constant 0 : index
      %c0_18 = arith.constant 0 : index
      %32 = vector.load %arg3[%c0_16, %c0_17, %c0_18] : memref<1x8x1xf32, #tpu.memory_space<vmem>>, vector<1x8x1xf32>
      tpu.vector_store %arg3[%c0_16, %c0_17, %c0_18], %31 {strides = array<i32>} : memref<1x8x1xf32, #tpu.memory_space<vmem>>, vector<1x8x1xf32>,
    } else {
    }
    return
  }
  func.func @transform_0(%arg0: i32, %arg1: i32) -> (i32, i32) {
    %c1_i32 = arith.constant 1 : i32
    %0 = arith.muli %arg0, %c1_i32 : i32
    %1 = arith.addi %0, %arg1 : i32
    %c0_i32 = arith.constant 0 : i32
    %c0_i32_0 = arith.constant 0 : i32
    return %c0_i32, %1 : i32, i32
  }
  func.func @transform_1(%arg0: i32, %arg1: i32) -> (i32, i32, i32) {
    %c0_i32 = arith.constant 0 : i32
    %c0_i32_0 = arith.constant 0 : i32
    %c0_i32_1 = arith.constant 0 : i32
    return %arg0, %c0_i32, %c0_i32_0 : i32, i32, i32
  }
}

</mosaic_0001>

<llo_original>
// kernel: tpu_custom_call.1
$region0: #{tpu_custom_call.1}
  #allocation0 [shape = 'u32[]', space=smem, size = 0x4, offset = 0x4, fixed_abs, tag = 'smem constant byte address 0x4 - core index']
  #allocation1 [shape = 'u32[72,128]{1,0:T(1,128)}', space=vmem, size = 0x9000, scoped, tag = 'internal scratch']
  #allocation2 [shape = 'f32[8,2048]{1,0:T(8,128)}', space=vmem, size = 0x10000, scoped, tag = 'scratch operand']
  %s0 = inlined_call_operand.hbm [shape: f32[8,16384], index: 0, kind: input, shape index: {}]
  %s1 = inlined_call_operand.vmem [shape: f32[2,8,1], index: 1, kind: output, shape index: {}]
  %s2 = sld [smem:[#allocation0]]
  $region49: #{tpu_custom_call.1} parent=0
    _
  %s4 = ssub.s32 1, %s2
  %s5 = scalar_select 0, %s4, %s2
  $region1: #{tpu_custom_call.1} parent=0
    #allocation3 [shape = 'u8[524288]{0}', space=vmem, size = 0x80000, scoped, tag = 'input window, operand 0']
    #allocation4 [shape = 's32[2]{0}', space=sflag, size = 0x8, scoped, tag = 'scoped memory for tpu_custom_call.1']
    %6 = vsyncpa [#allocation4], 0
    %s7 = scalar_lea.sflag [#allocation4], 1
    %8 = vsyncpa %s7, 0
    loop: start=0, step=1, limit=4
    $region2: #{tpu_custom_call.1} parent=1 // loop_pre_header
      _
    $region3: #{tpu_custom_call.1} parent=1 // loop_header
      %s10 = sphi 0, %s14
      %p11 = scmp.ge.s32.totalorder %s10, 4
      %s17 = sphi 0, %s29
      %s18 = sphi 0, %s25
      %s19 = sphi 0, %s17
      %s20 = sphi 0, %s18
      %s21 = sphi 0, %s19
      %s22 = sphi 0, %s20
      %s34 = sphi 0, %s36
      %s37 = sphi 0, %s34
      %s38 = sphi 0, %s37
      %s54 = sphi 0, %s38
      %s60 = sphi 0, %s62
      %s63 = sphi 0, %s60
      %s64 = sphi 0, %s63
      %s80 = sphi 0, %s64
    $region4: #{tpu_custom_call.1} parent=1 // loop_header_branch
      %13 = sbr.rel (%p11) target = $region8
    $region5: #{tpu_custom_call.1} parent=1 // loop_body
      %s15 = ssub.s32 %s10, 1
      %s16 = ssub.s32 %s10, 2
      %s23 = sadd.s32 1, %s18
      %p24 = scmp.ge.s32.totalorder %s23, 1
      %s25 = scalar_select %p24, 0, %s23
      %s26 = sadd.s32 1, %s17
      %s27 = scalar_select %p24, %s26, %s17
      %p28 = scmp.ge.s32.totalorder %s27, 2
      %s29 = scalar_select %p28, 0, %s27
      %s30 = sadd.s32 %s17, %s18
      %s31 = sadd.s32 %s29, %s25
      %s32 = ssub.s32 %s30, %s31
      %p33 = scmp.eq.s32.totalorder %s32, 0
      %s35 = sadd.s32 %s34, 1
      %s36 = scalar_select %p33, %s34, %s35
      %p39 = pneg %p33
      %p40 = scmp.eq.s32.totalorder %s10, 1
      %p41 = por %p39, %p40
      %p42 = scmp.ne.s32.totalorder %s34, %s37
      %p43 = scmp.eq.s32.totalorder %s10, 0
      %p44 = por %p42, %p43
      %p45 = scmp.ne.s32.totalorder %s34, %s37
      %p46 = scmp.eq.s32.totalorder %s15, 1
      %p47 = por %p45, %p46
      %p48 = scmp.ne.s32.totalorder %s37, %s38
      %p49 = scmp.eq.s32.totalorder %s15, 0
      %p50 = por %p48, %p49
      %p51 = scmp.ne.s32.totalorder %s37, %s38
      %p52 = scmp.eq.s32.totalorder %s16, 1
      %p53 = por %p51, %p52
      %p55 = scmp.ne.s32.totalorder %s38, %s54
      %p56 = scmp.eq.s32.totalorder %s16, 0
      %p57 = por %p55, %p56
      %s58 = ssub.s32 %s17, %s29
      %p59 = scmp.eq.s32.totalorder %s58, 0
      %s61 = sadd.s32 %s60, 1
      %s62 = scalar_select %p59, %s60, %s61
      %p65 = pneg %p59
      %p66 = scmp.eq.s32.totalorder %s10, 1
      %p67 = por %p65, %p66
      %p68 = scmp.ne.s32.totalorder %s60, %s63
      %p69 = scmp.eq.s32.totalorder %s10, 0
      %p70 = por %p68, %p69
      %p71 = scmp.ne.s32.totalorder %s60, %s63
      %p72 = scmp.eq.s32.totalorder %s15, 1
      %p73 = por %p71, %p72
      %p74 = scmp.ne.s32.totalorder %s63, %s64
      %p75 = scmp.eq.s32.totalorder %s15, 0
      %p76 = por %p74, %p75
      %p77 = scmp.ne.s32.totalorder %s63, %s64
      %p78 = scmp.eq.s32.totalorder %s16, 1
      %p79 = por %p77, %p78
      %p81 = scmp.ne.s32.totalorder %s64, %s80
      %p82 = scmp.eq.s32.totalorder %s16, 0
      %p83 = por %p81, %p82
      %p84 = scmp.le.s32.totalorder 1, %s10
      %p85 = scmp.lt.s32.totalorder %s10, 3
      %p86 = pnand %p84, %p85
      %p87 = pneg %p86
      // Predicated region
      $region9: #{tpu_custom_call.1} parent=5 // pred_check
        _
      $region10: #{tpu_custom_call.1} parent=5 // pred_check_branch
        %89 = sbr.rel (%p86) target = $region12
      $region11: #{tpu_custom_call.1} parent=5 // pred_region
        %s90 = ssub.s32 %s10, 1
      $region12: #{tpu_custom_call.1} parent=5 // pred_fallthru
        _
      %p91 = scmp.lt.s32.totalorder %s10, 2
      // Predicated region
      $region13: #{tpu_custom_call.1} parent=5 // pred_check
        %p92 = pneg %p91
      $region14: #{tpu_custom_call.1} parent=5 // pred_check_branch
        %94 = sbr.rel (%p92) target = $region16
      $region15: #{tpu_custom_call.1} parent=5 // pred_region
        // Predicated region
        $region17: #{tpu_custom_call.1} parent=15 // pred_check
          %p95 = pneg %p44
        $region18: #{tpu_custom_call.1} parent=15 // pred_check_branch
          %97 = sbr.rel (%p95) target = $region20
        $region19: #{tpu_custom_call.1} parent=15 // pred_region
          %s98 = sand.u32 %s34, 1
          %s99 = scalar_lea.sflag [#allocation4], %s98
          %s100 = sand.u32 %s34, 1
          %s101 = smul.addr %s100, 512
          %s102 = scalar_lea.vmem [#allocation3], %s101
          %s103 = sadd.s32 %s17, %s18
          %s104 = smul.u32 64, %s103
          %106 = vsyncadd %s99, 0
          %s107 = smul.addr %s104, 8
          %s108 = scalar_lea.hbm %s0, %s107
          %s110 = sshll.u32 %s108, 4
          %s111 = int_to_ptr.hbm [resolvable:$true] %s110
          %s112 = sshll.u32 %s102, 4
          %s113 = int_to_ptr.vmem [resolvable:$true] %s112
          %115 = dma.hbm_to_vmem [thread:$0]  %s111, 8192, %s113, %s99
        $region20: #{tpu_custom_call.1} parent=15 // pred_fallthru
          _
      $region16: #{tpu_custom_call.1} parent=5 // pred_fallthru
        _
      %p116 = scmp.le.s32.totalorder 1, %s10
      %p117 = scmp.lt.s32.totalorder %s10, 3
      %p118 = pnand %p116, %p117
      %p119 = pneg %p118
      // Predicated region
      $region21: #{tpu_custom_call.1} parent=5 // pred_check
        _
      $region22: #{tpu_custom_call.1} parent=5 // pred_check_branch
        %121 = sbr.rel (%p118) target = $region24
      $region23: #{tpu_custom_call.1} parent=5 // pred_region
        %s122 = ssub.s32 %s10, 1
        %s123 = sand.u32 %s37, 1
        %s124 = scalar_lea.sflag [#allocation4], %s123
        %s125 = sand.u32 %s37, 1
        %s126 = smul.addr %s125, 512
        %s127 = scalar_lea.vmem [#allocation3], %s126
        // Predicated region
        $region25: #{tpu_custom_call.1} parent=23 // pred_check
          %p128 = pneg %p50
        $region26: #{tpu_custom_call.1} parent=23 // pred_check_branch
          %130 = sbr.rel (%p128) target = $region28
        $region27: #{tpu_custom_call.1} parent=23 // pred_region
          %132 = dma.done %s124, 8192
        $region28: #{tpu_custom_call.1} parent=23 // pred_fallthru
          _
        %s133 = sand.u32 %s37, 1
        %s134 = scalar_lea.sflag [#allocation4], %s133
        %s135 = sand.u32 %s37, 1
        %s136 = smul.addr %s135, 512
        %s137 = scalar_lea.vmem [#allocation3], %s136
        %p138 = pneg %p50
        %p139 = pneg %p47
        %p140 = pneg %p76
        %p141 = pneg %p73
        %p142 = scmp.lt.s32.totalorder %s19, 1
        %s143 = scalar_select %p142, %s19, 1
        %s144 = smul.addr %s143, 8
        %s145 = scalar_lea.vmem %s1, %s144
        %s146 = sadd.s32 %s19, %s20
        %s147 = smul.u32 64, %s146
        %p148 = scmp.lt.s32.totalorder %s19, 1
        %s149 = scalar_select %p148, %s19, 1
        %s150 = smul.addr %s149, 8
        %s151 = scalar_lea.vmem %s1, %s150
        %p152 = scmp.eq.s32.totalorder %s20, 0
        // Predicated region
        $region29: #{tpu_custom_call.1} parent=23 // pred_check
          %p153 = pneg %p152
        $region30: #{tpu_custom_call.1} parent=23 // pred_check_branch
          %155 = sbr.rel (%p153) target = $region32
        $region31: #{tpu_custom_call.1} parent=23 // pred_region
          %156 = vst [vmem:[#allocation2] sm:$0xff] 0.0
          %157 = vst [vmem:[#allocation2 + $0x8] sm:$0xff] 0.0
          %158 = vst [vmem:[#allocation2 + $0x10] sm:$0xff] 0.0
          %159 = vst [vmem:[#allocation2 + $0x18] sm:$0xff] 0.0
          %160 = vst [vmem:[#allocation2 + $0x20] sm:$0xff] 0.0
          %161 = vst [vmem:[#allocation2 + $0x28] sm:$0xff] 0.0
          %162 = vst [vmem:[#allocation2 + $0x30] sm:$0xff] 0.0
          %163 = vst [vmem:[#allocation2 + $0x38] sm:$0xff] 0.0
          %164 = vst [vmem:[#allocation2 + $0x40] sm:$0xff] 0.0
          %165 = vst [vmem:[#allocation2 + $0x48] sm:$0xff] 0.0
          %166 = vst [vmem:[#allocation2 + $0x50] sm:$0xff] 0.0
          %167 = vst [vmem:[#allocation2 + $0x58] sm:$0xff] 0.0
          %168 = vst [vmem:[#allocation2 + $0x60] sm:$0xff] 0.0
          %169 = vst [vmem:[#allocation2 + $0x68] sm:$0xff] 0.0
          %170 = vst [vmem:[#allocation2 + $0x70] sm:$0xff] 0.0
          %171 = vst [vmem:[#allocation2 + $0x78] sm:$0xff] 0.0
        $region32: #{tpu_custom_call.1} parent=23 // pred_fallthru
          _
        %v172 = vld [vmem:[#allocation2] sm:$0xff]
        %v173 = vld [vmem:[#allocation2 + $0x8] sm:$0xff]
        %v174 = vld [vmem:[#allocation2 + $0x10] sm:$0xff]
        %v175 = vld [vmem:[#allocation2 + $0x18] sm:$0xff]
        %v176 = vld [vmem:[#allocation2 + $0x20] sm:$0xff]
        %v177 = vld [vmem:[#allocation2 + $0x28] sm:$0xff]
        %v178 = vld [vmem:[#allocation2 + $0x30] sm:$0xff]
        %v179 = vld [vmem:[#allocation2 + $0x38] sm:$0xff]
        %v180 = vld [vmem:[#allocation2 + $0x40] sm:$0xff]
        %v181 = vld [vmem:[#allocation2 + $0x48] sm:$0xff]
        %v182 = vld [vmem:[#allocation2 + $0x50] sm:$0xff]
        %v183 = vld [vmem:[#allocation2 + $0x58] sm:$0xff]
        %v184 = vld [vmem:[#allocation2 + $0x60] sm:$0xff]
        %v185 = vld [vmem:[#allocation2 + $0x68] sm:$0xff]
        %v186 = vld [vmem:[#allocation2 + $0x70] sm:$0xff]
        %v187 = vld [vmem:[#allocation2 + $0x78] sm:$0xff]
        %v188 = vld [vmem:[%s127] sm:$0xff]
        %v189 = vld [vmem:[%s127 + $0x8] sm:$0xff]
        %v190 = vld [vmem:[%s127 + $0x10] sm:$0xff]
        %v191 = vld [vmem:[%s127 + $0x18] sm:$0xff]
        %v192 = vld [vmem:[%s127 + $0x20] sm:$0xff]
        %v193 = vld [vmem:[%s127 + $0x28] sm:$0xff]
        %v194 = vld [vmem:[%s127 + $0x30] sm:$0xff]
        %v195 = vld [vmem:[%s127 + $0x38] sm:$0xff]
        %v196 = vld [vmem:[%s127 + $0x40] sm:$0xff]
        %v197 = vld [vmem:[%s127 + $0x48] sm:$0xff]
        %v198 = vld [vmem:[%s127 + $0x50] sm:$0xff]
        %v199 = vld [vmem:[%s127 + $0x58] sm:$0xff]
        %v200 = vld [vmem:[%s127 + $0x60] sm:$0xff]
        %v201 = vld [vmem:[%s127 + $0x68] sm:$0xff]
        %v202 = vld [vmem:[%s127 + $0x70] sm:$0xff]
        %v203 = vld [vmem:[%s127 + $0x78] sm:$0xff]
        %v204 = vadd.f32 %v172, %v188
        %v205 = vadd.f32 %v173, %v189
        %v206 = vadd.f32 %v174, %v190
        %v207 = vadd.f32 %v175, %v191
        %v208 = vadd.f32 %v176, %v192
        %v209 = vadd.f32 %v177, %v193
        %v210 = vadd.f32 %v178, %v194
        %v211 = vadd.f32 %v179, %v195
        %v212 = vadd.f32 %v180, %v196
        %v213 = vadd.f32 %v181, %v197
        %v214 = vadd.f32 %v182, %v198
        %v215 = vadd.f32 %v183, %v199
        %v216 = vadd.f32 %v184, %v200
        %v217 = vadd.f32 %v185, %v201
        %v218 = vadd.f32 %v186, %v202
        %v219 = vadd.f32 %v187, %v203
        %s220 = scalar_lea.vmem %s127, 128 [#allocation3]
        %v221 = vld [vmem:[%s220] sm:$0xff]
        %v222 = vld [vmem:[%s220 + $0x8] sm:$0xff]
        %v223 = vld [vmem:[%s220 + $0x10] sm:$0xff]
        %v224 = vld [vmem:[%s220 + $0x18] sm:$0xff]
        %v225 = vld [vmem:[%s220 + $0x20] sm:$0xff]
        %v226 = vld [vmem:[%s220 + $0x28] sm:$0xff]
        %v227 = vld [vmem:[%s220 + $0x30] sm:$0xff]
        %v228 = vld [vmem:[%s220 + $0x38] sm:$0xff]
        %v229 = vld [vmem:[%s220 + $0x40] sm:$0xff]
        %v230 = vld [vmem:[%s220 + $0x48] sm:$0xff]
        %v231 = vld [vmem:[%s220 + $0x50] sm:$0xff]
        %v232 = vld [vmem:[%s220 + $0x58] sm:$0xff]
        %v233 = vld [vmem:[%s220 + $0x60] sm:$0xff]
        %v234 = vld [vmem:[%s220 + $0x68] sm:$0xff]
        %v235 = vld [vmem:[%s220 + $0x70] sm:$0xff]
        %v236 = vld [vmem:[%s220 + $0x78] sm:$0xff]
        %v237 = vadd.f32 %v204, %v221
        %v238 = vadd.f32 %v205, %v222
        %v239 = vadd.f32 %v206, %v223
        %v240 = vadd.f32 %v207, %v224
        %v241 = vadd.f32 %v208, %v225
        %v242 = vadd.f32 %v209, %v226
        %v243 = vadd.f32 %v210, %v227
        %v244 = vadd.f32 %v211, %v228
        %v245 = vadd.f32 %v212, %v229
        %v246 = vadd.f32 %v213, %v230
        %v247 = vadd.f32 %v214, %v231
        %v248 = vadd.f32 %v215, %v232
        %v249 = vadd.f32 %v216, %v233
        %v250 = vadd.f32 %v217, %v234
        %v251 = vadd.f32 %v218, %v235
        %v252 = vadd.f32 %v219, %v236
        %s253 = scalar_lea.vmem %s127, 256 [#allocation3]
        %v254 = vld [vmem:[%s253] sm:$0xff]
        %v255 = vld [vmem:[%s253 + $0x8] sm:$0xff]
        %v256 = vld [vmem:[%s253 + $0x10] sm:$0xff]
        %v257 = vld [vmem:[%s253 + $0x18] sm:$0xff]
        %v258 = vld [vmem:[%s253 + $0x20] sm:$0xff]
        %v259 = vld [vmem:[%s253 + $0x28] sm:$0xff]
        %v260 = vld [vmem:[%s253 + $0x30] sm:$0xff]
        %v261 = vld [vmem:[%s253 + $0x38] sm:$0xff]
        %v262 = vld [vmem:[%s253 + $0x40] sm:$0xff]
        %v263 = vld [vmem:[%s253 + $0x48] sm:$0xff]
        %v264 = vld [vmem:[%s253 + $0x50] sm:$0xff]
        %v265 = vld [vmem:[%s253 + $0x58] sm:$0xff]
        %v266 = vld [vmem:[%s253 + $0x60] sm:$0xff]
        %v267 = vld [vmem:[%s253 + $0x68] sm:$0xff]
        %v268 = vld [vmem:[%s253 + $0x70] sm:$0xff]
        %v269 = vld [vmem:[%s253 + $0x78] sm:$0xff]
        %v270 = vadd.f32 %v237, %v254
        %v271 = vadd.f32 %v238, %v255
        %v272 = vadd.f32 %v239, %v256
        %v273 = vadd.f32 %v240, %v257
        %v274 = vadd.f32 %v241, %v258
        %v275 = vadd.f32 %v242, %v259
        %v276 = vadd.f32 %v243, %v260
        %v277 = vadd.f32 %v244, %v261
        %v278 = vadd.f32 %v245, %v262
        %v279 = vadd.f32 %v246, %v263
        %v280 = vadd.f32 %v247, %v264
        %v281 = vadd.f32 %v248, %v265
        %v282 = vadd.f32 %v249, %v266
        %v283 = vadd.f32 %v250, %v267
        %v284 = vadd.f32 %v251, %v268
        %v285 = vadd.f32 %v252, %v269
        %s286 = scalar_lea.vmem %s127, 384 [#allocation3]
        %v287 = vld [vmem:[%s286] sm:$0xff]
        %v288 = vld [vmem:[%s286 + $0x8] sm:$0xff]
        %v289 = vld [vmem:[%s286 + $0x10] sm:$0xff]
        %v290 = vld [vmem:[%s286 + $0x18] sm:$0xff]
        %v291 = vld [vmem:[%s286 + $0x20] sm:$0xff]
        %v292 = vld [vmem:[%s286 + $0x28] sm:$0xff]
        %v293 = vld [vmem:[%s286 + $0x30] sm:$0xff]
        %v294 = vld [vmem:[%s286 + $0x38] sm:$0xff]
        %v295 = vld [vmem:[%s286 + $0x40] sm:$0xff]
        %v296 = vld [vmem:[%s286 + $0x48] sm:$0xff]
        %v297 = vld [vmem:[%s286 + $0x50] sm:$0xff]
        %v298 = vld [vmem:[%s286 + $0x58] sm:$0xff]
        %v299 = vld [vmem:[%s286 + $0x60] sm:$0xff]
        %v300 = vld [vmem:[%s286 + $0x68] sm:$0xff]
        %v301 = vld [vmem:[%s286 + $0x70] sm:$0xff]
        %v302 = vld [vmem:[%s286 + $0x78] sm:$0xff]
        %v303 = vadd.f32 %v270, %v287
        %v304 = vadd.f32 %v271, %v288
        %v305 = vadd.f32 %v272, %v289
        %v306 = vadd.f32 %v273, %v290
        %v307 = vadd.f32 %v274, %v291
        %v308 = vadd.f32 %v275, %v292
        %v309 = vadd.f32 %v276, %v293
        %v310 = vadd.f32 %v277, %v294
        %v311 = vadd.f32 %v278, %v295
        %v312 = vadd.f32 %v279, %v296
        %v313 = vadd.f32 %v280, %v297
        %v314 = vadd.f32 %v281, %v298
        %v315 = vadd.f32 %v282, %v299
        %v316 = vadd.f32 %v283, %v300
        %v317 = vadd.f32 %v284, %v301
        %v318 = vadd.f32 %v285, %v302
        %319 = vst [vmem:[#allocation2] sm:$0xff] %v303
        %320 = vst [vmem:[#allocation2 + $0x8] sm:$0xff] %v304
        %321 = vst [vmem:[#allocation2 + $0x10] sm:$0xff] %v305
        %322 = vst [vmem:[#allocation2 + $0x18] sm:$0xff] %v306
        %323 = vst [vmem:[#allocation2 + $0x20] sm:$0xff] %v307
        %324 = vst [vmem:[#allocation2 + $0x28] sm:$0xff] %v308
        %325 = vst [vmem:[#allocation2 + $0x30] sm:$0xff] %v309
        %326 = vst [vmem:[#allocation2 + $0x38] sm:$0xff] %v310
        %327 = vst [vmem:[#allocation2 + $0x40] sm:$0xff] %v311
        %328 = vst [vmem:[#allocation2 + $0x48] sm:$0xff] %v312
        %329 = vst [vmem:[#allocation2 + $0x50] sm:$0xff] %v313
        %330 = vst [vmem:[#allocation2 + $0x58] sm:$0xff] %v314
        %331 = vst [vmem:[#allocation2 + $0x60] sm:$0xff] %v315
        %332 = vst [vmem:[#allocation2 + $0x68] sm:$0xff] %v316
        %333 = vst [vmem:[#allocation2 + $0x70] sm:$0xff] %v317
        %334 = vst [vmem:[#allocation2 + $0x78] sm:$0xff] %v318
        // Predicated region
        $region33: #{tpu_custom_call.1} parent=23 // pred_check
          %p335 = pneg %p152
        $region34: #{tpu_custom_call.1} parent=23 // pred_check_branch
          %337 = sbr.rel (%p335) target = $region36
        $region35: #{tpu_custom_call.1} parent=23 // pred_region
          %v338 = vld [vmem:[#allocation2] sm:$0xff]
          %v339 = vld [vmem:[#allocation2 + $0x8] sm:$0xff]
          %v340 = vld [vmem:[#allocation2 + $0x10] sm:$0xff]
          %v341 = vld [vmem:[#allocation2 + $0x18] sm:$0xff]
          %v342 = vld [vmem:[#allocation2 + $0x20] sm:$0xff]
          %v343 = vld [vmem:[#allocation2 + $0x28] sm:$0xff]
          %v344 = vld [vmem:[#allocation2 + $0x30] sm:$0xff]
          %v345 = vld [vmem:[#allocation2 + $0x38] sm:$0xff]
          %v346 = vld [vmem:[#allocation2 + $0x40] sm:$0xff]
          %v347 = vld [vmem:[#allocation2 + $0x48] sm:$0xff]
          %v348 = vld [vmem:[#allocation2 + $0x50] sm:$0xff]
          %v349 = vld [vmem:[#allocation2 + $0x58] sm:$0xff]
          %v350 = vld [vmem:[#allocation2 + $0x60] sm:$0xff]
          %v351 = vld [vmem:[#allocation2 + $0x68] sm:$0xff]
          %v352 = vld [vmem:[#allocation2 + $0x70] sm:$0xff]
          %v353 = vld [vmem:[#allocation2 + $0x78] sm:$0xff]
          %v354 = vadd.f32 %v338, %v339
          %v355 = vadd.f32 %v354, %v340
          %v356 = vadd.f32 %v355, %v341
          %v357 = vadd.f32 %v356, %v342
          %v358 = vadd.f32 %v357, %v343
          %v359 = vadd.f32 %v358, %v344
          %v360 = vadd.f32 %v359, %v345
          %v361 = vadd.f32 %v360, %v346
          %v362 = vadd.f32 %v361, %v347
          %v363 = vadd.f32 %v362, %v348
          %v364 = vadd.f32 %v363, %v349
          %v365 = vadd.f32 %v364, %v350
          %v366 = vadd.f32 %v365, %v351
          %v367 = vadd.f32 %v366, %v352
          %v368 = vadd.f32 %v367, %v353
          %369 = vadd.xlane.f32.xlu0 %v368
          %v370 = vpop.xlane.xlu0 %369
          %vm371 = vcmask 7168
          %372 = vst.msk [vmem:[%s151] sm:$0xff] %vm371, %v370
        $region36: #{tpu_custom_call.1} parent=23 // pred_fallthru
          _
        %p373 = scmp.lt.s32.totalorder %s19, 1
        %s374 = scalar_select %p373, %s19, 1
        %s375 = smul.addr %s374, 8
        %s376 = scalar_lea.vmem %s1, %s375
        // Predicated region
        $region37: #{tpu_custom_call.1} parent=23 // pred_check
          %p377 = pneg %p73
        $region38: #{tpu_custom_call.1} parent=23 // pred_check_branch
          %379 = sbr.rel (%p377) target = $region40
        $region39: #{tpu_custom_call.1} parent=23 // pred_region
          _
        $region40: #{tpu_custom_call.1} parent=23 // pred_fallthru
          _
      $region24: #{tpu_custom_call.1} parent=5 // pred_fallthru
        _
      %p380 = scmp.le.s32.totalorder 2, %s10
      // Predicated region
      $region41: #{tpu_custom_call.1} parent=5 // pred_check
        %p381 = pneg %p380
      $region42: #{tpu_custom_call.1} parent=5 // pred_check_branch
        %383 = sbr.rel (%p381) target = $region44
      $region43: #{tpu_custom_call.1} parent=5 // pred_region
        %s384 = ssub.s32 %s10, 2
        // Predicated region
        $region45: #{tpu_custom_call.1} parent=43 // pred_check
          %p385 = pneg %p79
        $region46: #{tpu_custom_call.1} parent=43 // pred_check_branch
          %387 = sbr.rel (%p385) target = $region48
        $region47: #{tpu_custom_call.1} parent=43 // pred_region
          %p388 = scmp.lt.s32.totalorder %s21, 1
          %s389 = scalar_select %p388, %s21, 1
          %s390 = smul.addr %s389, 8
          %s391 = scalar_lea.vmem %s1, %s390
        $region48: #{tpu_custom_call.1} parent=43 // pred_fallthru
          _
      $region44: #{tpu_custom_call.1} parent=5 // pred_fallthru
        _
    $region6: #{tpu_custom_call.1} parent=1 // loop_footer
      %s14 = sadd.s32 1, %s10
    $region7: #{tpu_custom_call.1} parent=1 // loop_footer_branch
      %9 = sbr.rel target = $region3
    $region8: #{tpu_custom_call.1} parent=1 // loop_exit
      _
    %392 = vsyncpa [#allocation4], 1
    %s393 = scalar_lea.sflag [#allocation4], 1
    %394 = vsyncpa %s393, 1

</llo_original>
